<compile_context>
chip_gen: v5e
topology: v5e:2x2
jax: 0.10.0
libtpu: 0.0.40
codegen_flags: <defaults>
</compile_context>

<pallas_src>
import jax
import jax.numpy as jnp
from jax.experimental import pallas as pl
from jax.experimental.pallas import tpu as pltpu


# ----------------------------------------------------------------------------
# Base class: abstract forward + zero-cost getStates pass-through.
# ----------------------------------------------------------------------------
def base_model_srl_forward(x):
    """Abstract BaseModelSRL.forward.

    # TODO(synk): abstract in PyTorch (raises NotImplementedError); concrete
    # SRL models override it — see `srl_state_block_forward` for the Pallas
    # compute hook a subclass would plug its state extraction into.
    """
    raise NotImplementedError(
        "BaseModelSRL.forward is abstract; concrete SRL models override it."
    )


def get_states(observations, forward_fn=base_model_srl_forward):
    """Pallas equivalent of BaseModelSRL.getStates.

    getStates simply dispatches to forward().  Per the performance review,
    no kernel is launched here for the base class — the pass-through itself
    is free; the cost lives entirely in the concrete forward_fn.
    """
    return forward_fn(observations)


# ----------------------------------------------------------------------------
# Concrete-subclass compute hook: lane-dense, tiled, software-pipelined.
# Real SRL encoders (conv / linear) should get their own MXU-shaped kernel;
# this elementwise slab is the placeholder where the (identity) base-class
# state extraction runs.
# ----------------------------------------------------------------------------
_MAX_LANE_BLOCK = 2048            # lane width cap (multiple of 128)
_TARGET_BLOCK_BYTES = 8 << 20     # ~8 MiB per block (amortizes per-step cost)
_VMEM_LIMIT_BYTES = 48 << 20      # 2x in + 2x out buffers <= ~32 MiB, headroom


def _srl_state_block_kernel(x_ref, o_ref):
    # Concrete SRL subclasses implement their state extraction on this
    # lane-dense VMEM tile; the base class defines no transformation.
    o_ref[...] = x_ref[...]


def srl_state_block_forward(x):
    """Tiled, lane-dense state-extraction hook (identity for the base class).

    The observation tensor is viewed (no pad, no slice) as a 2-D slab whose
    last dim is a multiple of 128 that exactly divides x.size, then pipelined
    over a 1-D "parallel" grid of ~8 MiB blocks.
    """
    n = x.size
    itemsize = jnp.dtype(x.dtype).itemsize

    # Largest multiple-of-128 lane width (<= cap) that divides x.size exactly,
    # so reshape is a pure view and no padding / slicing passes are needed.
    cols = 0
    c = _MAX_LANE_BLOCK
    while c >= 128:
        if n % c == 0:
            cols = c
            break
        c -= 128

    if cols == 0:
        # x.size not a multiple of 128: single full-array block (legal since
        # block shape == full dims).  Fine for small base-class observations.
        lead = n // x.shape[-1]
        x2d = x.reshape(lead, x.shape[-1])
        out2d = pl.pallas_call(
            _srl_state_block_kernel,
            out_shape=jax.ShapeDtypeStruct(x2d.shape, x.dtype),
        )(x2d)
        return out2d.reshape(x.shape)

    rows = n // cols
    x2d = x.reshape(rows, cols)

    # Rows per block: multiple of 32 (safe for bf16/int8 sublane packing) and
    # ~8 MiB per block, or the full row extent if it already fits.
    max_rows = max(32, (_TARGET_BLOCK_BYTES // (cols * itemsize)) // 32 * 32)
    block_rows = rows if rows <= max_rows else max_rows
    grid = (pl.cdiv(rows, block_rows),)  # Pallas masks the ragged last block.

    out2d = pl.pallas_call(
        _srl_state_block_kernel,
        out_shape=jax.ShapeDtypeStruct((rows, cols), x.dtype),
        grid=grid,
        in_specs=[pl.BlockSpec((block_rows, cols), lambda i: (i, 0))],
        out_specs=pl.BlockSpec((block_rows, cols), lambda i: (i, 0)),
        compiler_params=pltpu.CompilerParams(
            # Independent grid steps -> shard across TensorCores (v7x).
            dimension_semantics=("parallel",),
            # Raise the scoped-VMEM limit (v5e default is only 16 MiB) while
            # staying well inside v7x's 64 MiB physical VMEM.
            vmem_limit_bytes=_VMEM_LIMIT_BYTES,
        ),
    )(x2d)

    return out2d.reshape(x.shape)


if __name__ == "__main__":
    key = jax.random.PRNGKey(0)
    # Small NCHW observation batch: batch=2, channels=4, spatial=16x16.
    x = jax.random.normal(key, (2, 4, 16, 16), dtype=jnp.float32)

    # Base-class semantics: forward is abstract.
    try:
        base_model_srl_forward(x)
        raise AssertionError("abstract forward should raise NotImplementedError")
    except NotImplementedError:
        pass

    # getStates dispatching to a concrete forward hook (the Pallas kernel).
    states = jax.block_until_ready(get_states(x, forward_fn=srl_state_block_forward))

    # Sanity check: the base class performs no transformation on observations.
    assert states.shape == x.shape and states.dtype == x.dtype
    assert bool(jnp.allclose(states, x))

    print("KERNEL_OK")
</pallas_src>

<mosaic_0001>
module attributes {stable_mosaic.version = 11 : i64} {
  func.func @_srl_state_block_kernel(%arg0: i32, %arg1: memref<1x2048xf32, #tpu.memory_space<vmem>>, %arg2: memref<1x2048xf32, #tpu.memory_space<vmem>>) attributes {dimension_semantics = [#tpu.dimension_semantics<parallel>], iteration_bounds = array<i64: 1>, scalar_prefetch = 0 : i64, scratch_operands = 0 : i64, tpu.core_type = #tpu.core_type<tc>, window_params = [{transform_indices = @transform_0, window_bounds = array<i64: 1, 2048>}, {transform_indices = @transform_1, window_bounds = array<i64: 1, 2048>}]} {
    %c0 = arith.constant 0 : index
    %c0_0 = arith.constant 0 : index
    %0 = vector.load %arg1[%c0, %c0_0] : memref<1x2048xf32, #tpu.memory_space<vmem>>, vector<1x2048xf32>
    %c0_1 = arith.constant 0 : index
    %c0_2 = arith.constant 0 : index
    %1 = vector.load %arg2[%c0_1, %c0_2] : memref<1x2048xf32, #tpu.memory_space<vmem>>, vector<1x2048xf32>
    tpu.vector_store %arg2[%c0_1, %c0_2], %0 {strides = array<i32>} : memref<1x2048xf32, #tpu.memory_space<vmem>>, vector<1x2048xf32>,
    return
  }
  func.func @transform_0(%arg0: i32) -> (i32, i32) {
    %c0_i32 = arith.constant 0 : i32
    %c0_i32_0 = arith.constant 0 : i32
    return %arg0, %c0_i32 : i32, i32
  }
  func.func @transform_1(%arg0: i32) -> (i32, i32) {
    %c0_i32 = arith.constant 0 : i32
    %c0_i32_0 = arith.constant 0 : i32
    return %arg0, %c0_i32 : i32, i32
  }
}

</mosaic_0001>

<llo_original>
// kernel: tpu_custom_call.1
$region0: #{tpu_custom_call.1}
  #allocation0 [shape = 'u32[]', space=smem, size = 0x4, offset = 0x4, fixed_abs, tag = 'smem constant byte address 0x4 - core index']
  #allocation1 [shape = 'u32[72,128]{1,0:T(1,128)}', space=vmem, size = 0x9000, scoped, tag = 'internal scratch']
  %s0 = inlined_call_operand.hbm [shape: f32[1,2048], index: 0, kind: input, shape index: {}]
  %s1 = inlined_call_operand.hbm [shape: f32[1,2048], index: 1, kind: output, shape index: {}]
  %s2 = sld [smem:[#allocation0]]
  $region18: #{tpu_custom_call.1} parent=0
    _
  %s4 = ssub.s32 1, %s2
  %s5 = scalar_select 0, %s4, %s2
  $region1: #{tpu_custom_call.1} parent=0
    #allocation2 [shape = 'u8[8192]{0}', space=vmem, size = 0x2000, scoped, tag = 'input window, operand 0, single buffered']
    #allocation3 [shape = 's32[1]{0}', space=sflag, size = 0x4, scoped, tag = 'scoped memory for tpu_custom_call.1']
    #allocation4 [shape = 's32[1]{0}', space=sflag, size = 0x4, scoped, tag = 'scoped memory for tpu_custom_call.1']
    #allocation5 [shape = 'u8[8192]{0}', space=vmem, size = 0x2000, scoped, tag = 'output window, operand 0, single buffered']
    %6 = vsyncpa [#allocation3], 0
    %7 = vsyncpa [#allocation4], 0
    // Predicated region
    $region2: #{tpu_custom_call.1} parent=1 // pred_check
      _
    $region3: #{tpu_custom_call.1} parent=1 // pred_check_branch
      %9 = sbr.rel (0) target = $region5
    $region4: #{tpu_custom_call.1} parent=1 // pred_region
      %11 = vsyncadd [#allocation3], 0
      %s13 = sshll.u32 %s0, 4
      %s14 = int_to_ptr.hbm [resolvable:$true] %s13
      %s15 = sshll.u32 [#allocation2], 4
      %s16 = int_to_ptr.vmem [resolvable:$true] %s15
      %18 = dma.hbm_to_vmem [thread:$0]  %s14, 256, %s16, [#allocation3]
    $region5: #{tpu_custom_call.1} parent=1 // pred_fallthru
      _
    // Predicated region
    $region6: #{tpu_custom_call.1} parent=1 // pred_check
      _
    $region7: #{tpu_custom_call.1} parent=1 // pred_check_branch
      %20 = sbr.rel (0) target = $region9
    $region8: #{tpu_custom_call.1} parent=1 // pred_region
      %22 = dma.done [#allocation3], 256
    $region9: #{tpu_custom_call.1} parent=1 // pred_fallthru
      _
    %v23 = vld [vmem:[#allocation2] sm:$0xff]
    %v24 = vld [vmem:[#allocation2 + $0x8] sm:$0xff]
    %25 = vst [vmem:[#allocation5] sm:$0xff] %v23
    %26 = vst [vmem:[#allocation5 + $0x8] sm:$0xff] %v24
    // Predicated region
    $region10: #{tpu_custom_call.1} parent=1 // pred_check
      _
    $region11: #{tpu_custom_call.1} parent=1 // pred_check_branch
      %28 = sbr.rel (0) target = $region13
    $region12: #{tpu_custom_call.1} parent=1 // pred_region
      %30 = vsyncadd [#allocation4], 0
      %s32 = sshll.u32 [#allocation5], 4
      %s33 = int_to_ptr.vmem [resolvable:$true] %s32
      %s34 = sshll.u32 %s1, 4
      %s35 = int_to_ptr.hbm [resolvable:$true] %s34
      %37 = dma.vmem_to_hbm [thread:$0]  %s33, 256, %s35, [#allocation4]
    $region13: #{tpu_custom_call.1} parent=1 // pred_fallthru
      _
    // Predicated region
    $region14: #{tpu_custom_call.1} parent=1 // pred_check
      _
    $region15: #{tpu_custom_call.1} parent=1 // pred_check_branch
      %39 = sbr.rel (0) target = $region17
    $region16: #{tpu_custom_call.1} parent=1 // pred_region
      %41 = dma.done [#allocation4], 256
    $region17: #{tpu_custom_call.1} parent=1 // pred_fallthru
      _
    %42 = vsyncpa [#allocation3], 1
    %43 = vsyncpa [#allocation4], 1

</llo_original>
